<compile_context>
chip_gen: v6e
topology: v6e:2x2x1
jax: 0.10.0
libtpu: 0.0.40
codegen_flags: <defaults>
</compile_context>

<pallas_src>
import jax
import jax.numpy as jnp
from jax.experimental import pallas as pl
from jax.experimental.pallas import tpu as pltpu


def _sigmoid_kernel(x_ref, o_ref):
    # Exact sigmoid via one EUP transcendental: sigmoid(x) = 0.5*(1+tanh(x/2)).
    x = x_ref[...].astype(jnp.float32)
    o_ref[...] = (0.5 * (1.0 + jnp.tanh(0.5 * x))).astype(o_ref.dtype)


def _vmem_capacity_bytes():
    """Physical VMEM per TensorCore, with a conservative fallback."""
    try:
        cap = getattr(pltpu.get_tpu_info(), "vmem_capacity_bytes", None)
        if cap:
            return int(cap)
    except Exception:
        pass
    return 64 * 1024 * 1024  # v7x per-core VMEM; safe lower bound everywhere.


def _flatten_lane_dense(x):
    """Reshape x to (rows, lane) with lane a multiple of 128.

    Prefers a lane width that divides x.size exactly (free contiguous reshape,
    no padding copy). Falls back to padding to a multiple of 1024 only for
    awkward sizes. Returns (flat2d, original_size, lane)."""
    n = x.size
    flat = x.reshape(-1)
    for lane in (4096, 2048, 1024, 512, 256, 128):
        if n % lane == 0:
            return flat.reshape(n // lane, lane), n, lane
    lane = 1024
    padded = ((n + lane - 1) // lane) * lane
    flat = jnp.pad(flat, (0, padded - n))
    return flat.reshape(padded // lane, lane), n, lane


def _pick_tile_rows(rows_total, lane, itemsize, tile_budget_bytes, total_bytes):
    """Largest row tile (multiple of 16, bf16-safe) whose double-buffered
    in+out VMEM footprint fits the budget; keeps >=2 grid steps for
    non-trivial sizes so both v7x TensorCores get work."""
    bytes_per_row = lane * itemsize          # lane is a 128 multiple: padded footprint
    # in block + out block, each double-buffered -> 4x block bytes resident.
    max_rows = tile_budget_bytes // (4 * bytes_per_row)
    max_rows = max(int(max_rows), 16)
    if total_bytes > (4 << 20) and rows_total >= 32:
        # Guarantee >= 2 grid steps so the "parallel" axis can span both
        # TensorCores on v7x.
        max_rows = min(max_rows, rows_total // 2)
    if max_rows >= rows_total:
        return rows_total                    # one full-array block (always legal)
    return max((max_rows // 16) * 16, 16)


def latents_forward(latents, classes=None, *, min_pallas_bytes=1 << 20,
                    tile_budget_bytes=None):
    """Equivalent of Latents.forward().

    latents: (B, Z) parameter — returned unchanged (no copy, no HBM traffic).
    classes: (B, C) parameter or None — returns sigmoid(classes).
    """
    if classes is None:
        # Unconditional case (num_classes == 0): forward() returns latents only.
        return latents

    B, C = classes.shape
    itemsize = classes.dtype.itemsize
    total_bytes = B * C * itemsize

    if total_bytes < min_pallas_bytes:
        # Tiny parameter table: a pallas_call would be pure fixed overhead.
        return latents, jax.nn.sigmoid(classes)

    cap = _vmem_capacity_bytes()
    if tile_budget_bytes is None:
        tile_budget_bytes = (cap * 5) // 8   # ~40 MiB on v7x, ~80 MiB on v5e/v6e
    vmem_limit = (cap * 3) // 4              # ~48 MiB on v7x, ~96 MiB on v5e/v6e

    flat2d, n_elems, lane = _flatten_lane_dense(classes)
    rows_total = flat2d.shape[0]
    tile_rows = _pick_tile_rows(rows_total, lane, itemsize,
                                tile_budget_bytes, total_bytes)
    grid = (pl.cdiv(rows_total, tile_rows),)

    out_flat = pl.pallas_call(
        _sigmoid_kernel,
        out_shape=jax.ShapeDtypeStruct((rows_total, lane), classes.dtype),
        grid_spec=pltpu.PrefetchScalarGridSpec(
            num_scalar_prefetch=0,
            grid=grid,
            in_specs=[pl.BlockSpec((tile_rows, lane), lambda i: (i, 0))],
            out_specs=pl.BlockSpec((tile_rows, lane), lambda i: (i, 0)),
        ),
        compiler_params=pltpu.CompilerParams(
            dimension_semantics=("parallel",),
            vmem_limit_bytes=vmem_limit,
        ),
    )(flat2d)

    # Any pad (sigmoid(0)=0.5) is sliced away before reshaping back to (B, C).
    classes_sig = out_flat.reshape(-1)[:n_elems].reshape(B, C)
    return latents, classes_sig


if __name__ == "__main__":
    # Small shapes matching the module defaults: batch=32, z_dim=128, classes=1000.
    batch_size, z_dim, num_classes = 32, 128, 1000

    key = jax.random.PRNGKey(0)
    k_lat, k_cls = jax.random.split(key)
    latents = jax.random.normal(k_lat, (batch_size, z_dim), dtype=jnp.float32)
    classes = -3.9 + 0.3 * jax.random.normal(
        k_cls, (batch_size, num_classes), dtype=jnp.float32)

    ref = jax.nn.sigmoid(classes)

    # (1) Force the Pallas path (the default 1 MiB threshold would route this
    #     tiny table to jax.nn.sigmoid) with a small tile budget so the grid
    #     has >1 step plus a partial edge block, exercising the tiled path.
    lat_out, cls_out = latents_forward(
        latents, classes, min_pallas_bytes=0, tile_budget_bytes=256 * 1024)
    jax.block_until_ready((lat_out, cls_out))
    assert jnp.array_equal(lat_out, latents)
    assert cls_out.shape == (batch_size, num_classes)
    assert jnp.allclose(cls_out, ref, atol=1e-5, rtol=1e-5)

    # (2) Default path: tiny tables fall back to fused XLA sigmoid.
    lat_out2, cls_out2 = latents_forward(latents, classes)
    jax.block_until_ready((lat_out2, cls_out2))
    assert jnp.allclose(cls_out2, ref, atol=1e-6, rtol=1e-6)

    # (3) Unconditional case (num_classes == 0): only latents are returned.
    lat_only = latents_forward(latents, None)
    assert jnp.array_equal(lat_only, latents)

    print("KERNEL_OK")
</pallas_src>

<mosaic_0001>
module attributes {stable_mosaic.version = 11 : i64} {
  func.func @_sigmoid_kernel(%arg0: i32, %arg1: memref<64x256xf32, #tpu.memory_space<vmem>>, %arg2: memref<64x256xf32, #tpu.memory_space<vmem>>) attributes {dimension_semantics = [#tpu.dimension_semantics<parallel>], iteration_bounds = array<i64: 2>, scalar_prefetch = 0 : i64, scratch_operands = 0 : i64, tpu.core_type = #tpu.core_type<tc>, window_params = [{transform_indices = @transform_0, window_bounds = array<i64: 64, 256>}, {transform_indices = @transform_1, window_bounds = array<i64: 64, 256>}]} {
    %c0 = arith.constant 0 : index
    %c0_0 = arith.constant 0 : index
    %0 = vector.load %arg1[%c0, %c0_0] : memref<64x256xf32, #tpu.memory_space<vmem>>, vector<64x256xf32>
    %cst = arith.constant 5.000000e-01 : f32
    %1 = vector.broadcast %cst : f32 to vector<64x256xf32>
    %2 = arith.mulf %1, %0 : vector<64x256xf32>
    %3 = math.tanh %2 : vector<64x256xf32>
    %cst_1 = arith.constant 1.000000e+00 : f32
    %4 = vector.broadcast %cst_1 : f32 to vector<64x256xf32>
    %5 = arith.addf %4, %3 : vector<64x256xf32>
    %cst_2 = arith.constant 5.000000e-01 : f32
    %6 = vector.broadcast %cst_2 : f32 to vector<64x256xf32>
    %7 = arith.mulf %6, %5 : vector<64x256xf32>
    %c0_3 = arith.constant 0 : index
    %c0_4 = arith.constant 0 : index
    %8 = vector.load %arg2[%c0_3, %c0_4] : memref<64x256xf32, #tpu.memory_space<vmem>>, vector<64x256xf32>
    tpu.vector_store %arg2[%c0_3, %c0_4], %7 {strides = array<i32>} : memref<64x256xf32, #tpu.memory_space<vmem>>, vector<64x256xf32>,
    return
  }
  func.func @transform_0(%arg0: i32) -> (i32, i32) {
    %c0_i32 = arith.constant 0 : i32
    %c0_i32_0 = arith.constant 0 : i32
    return %arg0, %c0_i32 : i32, i32
  }
  func.func @transform_1(%arg0: i32) -> (i32, i32) {
    %c0_i32 = arith.constant 0 : i32
    %c0_i32_0 = arith.constant 0 : i32
    return %arg0, %c0_i32 : i32, i32
  }
}

</mosaic_0001>

<llo_original>
// kernel: tpu_custom_call.1
$region0: #{tpu_custom_call.1}
  #allocation0 [shape = 'u32[]', space=smem, size = 0x4, offset = 0x4, fixed_abs, tag = 'smem constant byte address 0x4 - core index']
  #allocation1 [shape = 'u32[144,128]{1,0:T(1,128)}', space=vmem, size = 0x12000, scoped, tag = 'internal scratch']
  %s0 = inlined_call_operand.hbm [shape: f32[125,256], index: 0, kind: input, shape index: {}]
  %s1 = inlined_call_operand.hbm [shape: f32[125,256], index: 1, kind: output, shape index: {}]
  %s2 = sld [smem:[#allocation0]]
  $region41: #{tpu_custom_call.1} parent=0
    _
  %s4 = ssub.s32 1, %s2
  %s5 = scalar_select 0, %s4, %s2
  $region1: #{tpu_custom_call.1} parent=0
    #allocation2 [shape = 'u8[131072]{0}', space=vmem, size = 0x20000, scoped, tag = 'input window, operand 0']
    #allocation3 [shape = 's32[2]{0}', space=sflag, size = 0x8, scoped, tag = 'scoped memory for tpu_custom_call.1']
    #allocation4 [shape = 's32[2]{0}', space=sflag, size = 0x8, scoped, tag = 'scoped memory for tpu_custom_call.1']
    #allocation5 [shape = 'u8[131072]{0}', space=vmem, size = 0x20000, scoped, tag = 'output window, operand 0']
    %6 = vsyncpa [#allocation3], 0
    %s7 = scalar_lea.sflag [#allocation3], 1
    %8 = vsyncpa %s7, 0
    %9 = vsyncpa [#allocation4], 0
    %s10 = scalar_lea.sflag [#allocation4], 1
    %11 = vsyncpa %s10, 0
    loop: start=0, step=1, limit=4
    $region2: #{tpu_custom_call.1} parent=1 // loop_pre_header
      _
    $region3: #{tpu_custom_call.1} parent=1 // loop_header
      %s13 = sphi 0, %s17
      %p14 = scmp.ge.s32.totalorder %s13, 4
      %s23 = sphi 0, %s25
      %s26 = sphi 0, %s23
      %s27 = sphi 0, %s26
      %s43 = sphi 0, %s27
      %s49 = sphi 0, %s51
      %s52 = sphi 0, %s49
      %s53 = sphi 0, %s52
      %s69 = sphi 0, %s53
    $region4: #{tpu_custom_call.1} parent=1 // loop_header_branch
      %16 = sbr.rel (%p14) target = $region8
    $region5: #{tpu_custom_call.1} parent=1 // loop_body
      %s18 = ssub.s32 %s13, 1
      %s19 = ssub.s32 %s13, 2
      %s20 = sadd.s32 %s13, 1
      %s21 = ssub.s32 %s13, %s20
      %p22 = scmp.eq.s32.totalorder %s21, 0
      %s24 = sadd.s32 %s23, 1
      %s25 = scalar_select %p22, %s23, %s24
      %p28 = pneg %p22
      %p29 = scmp.eq.s32.totalorder %s13, 1
      %p30 = por %p28, %p29
      %p31 = scmp.ne.s32.totalorder %s23, %s26
      %p32 = scmp.eq.s32.totalorder %s13, 0
      %p33 = por %p31, %p32
      %p34 = scmp.ne.s32.totalorder %s23, %s26
      %p35 = scmp.eq.s32.totalorder %s18, 1
      %p36 = por %p34, %p35
      %p37 = scmp.ne.s32.totalorder %s26, %s27
      %p38 = scmp.eq.s32.totalorder %s18, 0
      %p39 = por %p37, %p38
      %p40 = scmp.ne.s32.totalorder %s26, %s27
      %p41 = scmp.eq.s32.totalorder %s19, 1
      %p42 = por %p40, %p41
      %p44 = scmp.ne.s32.totalorder %s27, %s43
      %p45 = scmp.eq.s32.totalorder %s19, 0
      %p46 = por %p44, %p45
      %s47 = ssub.s32 %s13, %s20
      %p48 = scmp.eq.s32.totalorder %s47, 0
      %s50 = sadd.s32 %s49, 1
      %s51 = scalar_select %p48, %s49, %s50
      %p54 = pneg %p48
      %p55 = scmp.eq.s32.totalorder %s13, 1
      %p56 = por %p54, %p55
      %p57 = scmp.ne.s32.totalorder %s49, %s52
      %p58 = scmp.eq.s32.totalorder %s13, 0
      %p59 = por %p57, %p58
      %p60 = scmp.ne.s32.totalorder %s49, %s52
      %p61 = scmp.eq.s32.totalorder %s18, 1
      %p62 = por %p60, %p61
      %p63 = scmp.ne.s32.totalorder %s52, %s53
      %p64 = scmp.eq.s32.totalorder %s18, 0
      %p65 = por %p63, %p64
      %p66 = scmp.ne.s32.totalorder %s52, %s53
      %p67 = scmp.eq.s32.totalorder %s19, 1
      %p68 = por %p66, %p67
      %p70 = scmp.ne.s32.totalorder %s53, %s69
      %p71 = scmp.eq.s32.totalorder %s19, 0
      %p72 = por %p70, %p71
      %p73 = scmp.le.s32.totalorder 1, %s13
      %p74 = scmp.lt.s32.totalorder %s13, 3
      %p75 = pnand %p73, %p74
      %p76 = pneg %p75
      // Predicated region
      $region9: #{tpu_custom_call.1} parent=5 // pred_check
        _
      $region10: #{tpu_custom_call.1} parent=5 // pred_check_branch
        %78 = sbr.rel (%p75) target = $region12
      $region11: #{tpu_custom_call.1} parent=5 // pred_region
        %s79 = ssub.s32 %s13, 1
      $region12: #{tpu_custom_call.1} parent=5 // pred_fallthru
        _
      %p80 = scmp.lt.s32.totalorder %s13, 2
      // Predicated region
      $region13: #{tpu_custom_call.1} parent=5 // pred_check
        %p81 = pneg %p80
      $region14: #{tpu_custom_call.1} parent=5 // pred_check_branch
        %83 = sbr.rel (%p81) target = $region16
      $region15: #{tpu_custom_call.1} parent=5 // pred_region
        // Predicated region
        $region17: #{tpu_custom_call.1} parent=15 // pred_check
          %p84 = pneg %p33
        $region18: #{tpu_custom_call.1} parent=15 // pred_check_branch
          %86 = sbr.rel (%p84) target = $region20
        $region19: #{tpu_custom_call.1} parent=15 // pred_region
          %s87 = sand.u32 %s23, 1
          %s88 = scalar_lea.sflag [#allocation3], %s87
          %s89 = sand.u32 %s23, 1
          %s90 = smul.addr %s89, 128
          %s91 = scalar_lea.vmem [#allocation2], %s90
          %s92 = smul.u32 8, %s13
          %s94 = ssub.s32 2048, 2048
          %95 = vsyncadd %s88, %s94
          %s96 = smul.addr %s92, 2
          %s97 = smul.addr %s96, 128
          %s98 = scalar_lea.hbm %s0, %s97
          %s99 = sshll.u32 %s91, 4
          %s100 = int_to_ptr.vmem [resolvable:$true] %s99
          %105 = dma.hbm_to_vmem [thread:$0]  %s98, 2048, %s100, %s88, 256, 256, 16
        $region20: #{tpu_custom_call.1} parent=15 // pred_fallthru
          _
      $region16: #{tpu_custom_call.1} parent=5 // pred_fallthru
        _
      %p106 = scmp.le.s32.totalorder 1, %s13
      %p107 = scmp.lt.s32.totalorder %s13, 3
      %p108 = pnand %p106, %p107
      %p109 = pneg %p108
      // Predicated region
      $region21: #{tpu_custom_call.1} parent=5 // pred_check
        _
      $region22: #{tpu_custom_call.1} parent=5 // pred_check_branch
        %111 = sbr.rel (%p108) target = $region24
      $region23: #{tpu_custom_call.1} parent=5 // pred_region
        %s112 = ssub.s32 %s13, 1
        %s113 = sand.u32 %s26, 1
        %s114 = scalar_lea.sflag [#allocation3], %s113
        %s115 = sand.u32 %s26, 1
        %s116 = smul.addr %s115, 128
        %s117 = scalar_lea.vmem [#allocation2], %s116
        // Predicated region
        $region25: #{tpu_custom_call.1} parent=23 // pred_check
          %p118 = pneg %p39
        $region26: #{tpu_custom_call.1} parent=23 // pred_check_branch
          %120 = sbr.rel (%p118) target = $region28
        $region27: #{tpu_custom_call.1} parent=23 // pred_region
          %121 = dma.done %s114, 2048
        $region28: #{tpu_custom_call.1} parent=23 // pred_fallthru
          _
        %s122 = sand.u32 %s26, 1
        %s123 = scalar_lea.sflag [#allocation3], %s122
        %s124 = sand.u32 %s26, 1
        %s125 = smul.addr %s124, 128
        %s126 = scalar_lea.vmem [#allocation2], %s125
        %p127 = pneg %p39
        %p128 = pneg %p36
        %p129 = pneg %p65
        %p130 = pneg %p62
        %s131 = sand.u32 %s52, 1
        %s132 = scalar_lea.sflag [#allocation4], %s131
        %s133 = sand.u32 %s52, 1
        %s134 = smul.addr %s133, 128
        %s135 = scalar_lea.vmem [#allocation5], %s134
        %s136 = smul.u32 8, %s18
        %s137 = smul.u32 8, %s18
        %v138 = vld [vmem:[%s117] sm:$0xff]
        %v139 = vld [vmem:[%s117 + $0x8] sm:$0xff]
        %v140 = vld [vmem:[%s117 + $0x10] sm:$0xff]
        %v141 = vld [vmem:[%s117 + $0x18] sm:$0xff]
        %v142 = vld [vmem:[%s117 + $0x20] sm:$0xff]
        %v143 = vld [vmem:[%s117 + $0x28] sm:$0xff]
        %v144 = vld [vmem:[%s117 + $0x30] sm:$0xff]
        %v145 = vld [vmem:[%s117 + $0x38] sm:$0xff]
        %v146 = vld [vmem:[%s117 + $0x40] sm:$0xff]
        %v147 = vld [vmem:[%s117 + $0x48] sm:$0xff]
        %v148 = vld [vmem:[%s117 + $0x50] sm:$0xff]
        %v149 = vld [vmem:[%s117 + $0x58] sm:$0xff]
        %v150 = vld [vmem:[%s117 + $0x60] sm:$0xff]
        %v151 = vld [vmem:[%s117 + $0x68] sm:$0xff]
        %v152 = vld [vmem:[%s117 + $0x70] sm:$0xff]
        %v153 = vld [vmem:[%s117 + $0x78] sm:$0xff]
        %v154 = vmul.f32 %v138, 0.5
        %v155 = vmul.f32 %v139, 0.5
        %v156 = vmul.f32 %v140, 0.5
        %v157 = vmul.f32 %v141, 0.5
        %v158 = vmul.f32 %v142, 0.5
        %v159 = vmul.f32 %v143, 0.5
        %v160 = vmul.f32 %v144, 0.5
        %v161 = vmul.f32 %v145, 0.5
        %v162 = vmul.f32 %v146, 0.5
        %v163 = vmul.f32 %v147, 0.5
        %v164 = vmul.f32 %v148, 0.5
        %v165 = vmul.f32 %v149, 0.5
        %v166 = vmul.f32 %v150, 0.5
        %v167 = vmul.f32 %v151, 0.5
        %v168 = vmul.f32 %v152, 0.5
        %v169 = vmul.f32 %v153, 0.5
        %v170 = vtanh.pop %v154
        %v171 = vtanh.pop %v155
        %v172 = vtanh.pop %v156
        %v173 = vtanh.pop %v157
        %v174 = vtanh.pop %v158
        %v175 = vtanh.pop %v159
        %v176 = vtanh.pop %v160
        %v177 = vtanh.pop %v161
        %v178 = vtanh.pop %v162
        %v179 = vtanh.pop %v163
        %v180 = vtanh.pop %v164
        %v181 = vtanh.pop %v165
        %v182 = vtanh.pop %v166
        %v183 = vtanh.pop %v167
        %v184 = vtanh.pop %v168
        %v185 = vtanh.pop %v169
        %v186 = vadd.f32 %v170, 1.0
        %v187 = vadd.f32 %v171, 1.0
        %v188 = vadd.f32 %v172, 1.0
        %v189 = vadd.f32 %v173, 1.0
        %v190 = vadd.f32 %v174, 1.0
        %v191 = vadd.f32 %v175, 1.0
        %v192 = vadd.f32 %v176, 1.0
        %v193 = vadd.f32 %v177, 1.0
        %v194 = vadd.f32 %v178, 1.0
        %v195 = vadd.f32 %v179, 1.0
        %v196 = vadd.f32 %v180, 1.0
        %v197 = vadd.f32 %v181, 1.0
        %v198 = vadd.f32 %v182, 1.0
        %v199 = vadd.f32 %v183, 1.0
        %v200 = vadd.f32 %v184, 1.0
        %v201 = vadd.f32 %v185, 1.0
        %v202 = vmul.f32 %v186, 0.5
        %v203 = vmul.f32 %v187, 0.5
        %v204 = vmul.f32 %v188, 0.5
        %v205 = vmul.f32 %v189, 0.5
        %v206 = vmul.f32 %v190, 0.5
        %v207 = vmul.f32 %v191, 0.5
        %v208 = vmul.f32 %v192, 0.5
        %v209 = vmul.f32 %v193, 0.5
        %v210 = vmul.f32 %v194, 0.5
        %v211 = vmul.f32 %v195, 0.5
        %v212 = vmul.f32 %v196, 0.5
        %v213 = vmul.f32 %v197, 0.5
        %v214 = vmul.f32 %v198, 0.5
        %v215 = vmul.f32 %v199, 0.5
        %v216 = vmul.f32 %v200, 0.5
        %v217 = vmul.f32 %v201, 0.5
        %218 = vst [vmem:[%s135] sm:$0xff] %v202
        %219 = vst [vmem:[%s135 + $0x8] sm:$0xff] %v203
        %220 = vst [vmem:[%s135 + $0x10] sm:$0xff] %v204
        %221 = vst [vmem:[%s135 + $0x18] sm:$0xff] %v205
        %222 = vst [vmem:[%s135 + $0x20] sm:$0xff] %v206
        %223 = vst [vmem:[%s135 + $0x28] sm:$0xff] %v207
        %224 = vst [vmem:[%s135 + $0x30] sm:$0xff] %v208
        %225 = vst [vmem:[%s135 + $0x38] sm:$0xff] %v209
        %226 = vst [vmem:[%s135 + $0x40] sm:$0xff] %v210
        %227 = vst [vmem:[%s135 + $0x48] sm:$0xff] %v211
        %228 = vst [vmem:[%s135 + $0x50] sm:$0xff] %v212
        %229 = vst [vmem:[%s135 + $0x58] sm:$0xff] %v213
        %230 = vst [vmem:[%s135 + $0x60] sm:$0xff] %v214
        %231 = vst [vmem:[%s135 + $0x68] sm:$0xff] %v215
        %232 = vst [vmem:[%s135 + $0x70] sm:$0xff] %v216
        %233 = vst [vmem:[%s135 + $0x78] sm:$0xff] %v217
        %s234 = sand.u32 %s52, 1
        %s235 = scalar_lea.sflag [#allocation4], %s234
        %s236 = sand.u32 %s52, 1
        %s237 = smul.addr %s236, 128
        %s238 = scalar_lea.vmem [#allocation5], %s237
        // Predicated region
        $region29: #{tpu_custom_call.1} parent=23 // pred_check
          %p239 = pneg %p62
        $region30: #{tpu_custom_call.1} parent=23 // pred_check_branch
          %241 = sbr.rel (%p239) target = $region32
        $region31: #{tpu_custom_call.1} parent=23 // pred_region
          %s242 = smul.u32 8, %s18
          %s244 = ssub.s32 2048, 2048
          %245 = vsyncadd %s235, %s244
          %s246 = smul.addr %s242, 2
          %s247 = smul.addr %s246, 128
          %s248 = scalar_lea.hbm %s1, %s247
          %s249 = sshll.u32 %s238, 4
          %s250 = int_to_ptr.vmem [resolvable:$true] %s249
          %255 = dma.vmem_to_hbm [thread:$0]  %s250, 2048, %s248, %s235, 256, 256, 16
        $region32: #{tpu_custom_call.1} parent=23 // pred_fallthru
          _
      $region24: #{tpu_custom_call.1} parent=5 // pred_fallthru
        _
      %p256 = scmp.le.s32.totalorder 2, %s13
      // Predicated region
      $region33: #{tpu_custom_call.1} parent=5 // pred_check
        %p257 = pneg %p256
      $region34: #{tpu_custom_call.1} parent=5 // pred_check_branch
        %259 = sbr.rel (%p257) target = $region36
      $region35: #{tpu_custom_call.1} parent=5 // pred_region
        %s260 = ssub.s32 %s13, 2
        // Predicated region
        $region37: #{tpu_custom_call.1} parent=35 // pred_check
          %p261 = pneg %p68
        $region38: #{tpu_custom_call.1} parent=35 // pred_check_branch
          %263 = sbr.rel (%p261) target = $region40
        $region39: #{tpu_custom_call.1} parent=35 // pred_region
          %s264 = sand.u32 %s53, 1
          %s265 = scalar_lea.sflag [#allocation4], %s264
          %s266 = sand.u32 %s53, 1
          %s267 = smul.addr %s266, 128
          %s268 = scalar_lea.vmem [#allocation5], %s267
          %269 = dma.done %s265, 2048
        $region40: #{tpu_custom_call.1} parent=35 // pred_fallthru
          _
      $region36: #{tpu_custom_call.1} parent=5 // pred_fallthru
        _
    $region6: #{tpu_custom_call.1} parent=1 // loop_footer
      %s17 = sadd.s32 1, %s13
    $region7: #{tpu_custom_call.1} parent=1 // loop_footer_branch
      %12 = sbr.rel target = $region3
    $region8: #{tpu_custom_call.1} parent=1 // loop_exit
      _
    %270 = vsyncpa [#allocation3], 1
    %s271 = scalar_lea.sflag [#allocation3], 1
    %272 = vsyncpa %s271, 1
    %273 = vsyncpa [#allocation4], 1
    %s274 = scalar_lea.sflag [#allocation4], 1
    %275 = vsyncpa %s274, 1

</llo_original>
